<compile_context>
chip_gen: v7x
topology: tpu7x:2x2x1
jax: 0.10.0
libtpu: 0.0.40
codegen_flags: <defaults>
</compile_context>

<pallas_src>
import jax
import jax.numpy as jnp
from jax.experimental import pallas as pl
from jax.experimental.pallas import tpu as pltpu

LANES = 128             # vreg lane width (fast axis)
SUBLANES = 8            # f32 vreg sublane height
MAX_TILE_ROWS = 4096    # (4096, 128) f32 block = 2 MiB
PALLAS_MIN_ELEMS = 1 << 16  # below this, plain fused XLA beats kernel launch


def linear_kernel(x_ref, w_ref, b_ref, o_ref):
    # x_ref / o_ref: (tile_rows, 128) f32 VMEM blocks of the lane-dense slab.
    # w_ref / b_ref: (1,) f32 scalars resident in SMEM.
    o_ref[...] = x_ref[...] * w_ref[0] + b_ref[0]


def _round_up(v, m):
    return -(-v // m) * m


def net_forward(x, w, b):
    """Net.forward: y = x @ W.T + b with W (1,1), b (1,)  ==  y = x*w + b.

    x: (N, 1) float32, w: (1, 1), b: (1,).
    """
    n, in_dim = x.shape
    assert in_dim == 1
    assert x.dtype == jnp.float32, "kernel tiling (8-sublane, SMEM scalars) assumes float32"
    dtype = x.dtype

    w_s = w.reshape(-1).astype(jnp.float32)
    b_s = b.reshape(-1).astype(jnp.float32)

    # ---- small-N short circuit: launch/relayout overhead would dominate ----
    if n < PALLAS_MIN_ELEMS:
        return x * w_s[0] + b_s[0]

    # ---- lane-dense re-layout: (N, 1) -> (rows, 128) ----
    if n % LANES == 0:
        # zero-copy path: pure reshape, no pad, no output slice
        rows = n // LANES
        x2d = x.reshape(rows, LANES)
        padded = False
    else:
        # pad only up to the next multiple of 128 (not to a tile multiple)
        rows = -(-n // LANES)
        x2d = jnp.pad(x.reshape(-1), (0, rows * LANES - n)).reshape(rows, LANES)
        padded = True

    # ---- tiling ----
    tile_rows = min(MAX_TILE_ROWS, rows)
    # Guarantee >= 2 grid steps so v7x's two TensorCores both get work;
    # harmless on single-TC v5e/v6e.
    if rows > 2 * SUBLANES and pl.cdiv(rows, tile_rows) < 2:
        tile_rows = _round_up(pl.cdiv(rows, 2), SUBLANES)
    grid = (pl.cdiv(rows, tile_rows),)  # boundary (partial) blocks handled by Pallas

    n_slab = rows * LANES
    cost = pl.CostEstimate(
        flops=2 * n_slab, transcendentals=0, bytes_accessed=2 * 4 * n_slab)

    out2d = pl.pallas_call(
        linear_kernel,
        out_shape=jax.ShapeDtypeStruct((rows, LANES), dtype),
        grid_spec=pltpu.PrefetchScalarGridSpec(
            num_scalar_prefetch=0,
            grid=grid,
            in_specs=[
                # lane-dense, tiled, double-buffered input slab
                pl.BlockSpec((tile_rows, LANES), lambda i: (i, 0)),
                # scalar weight / bias in SMEM
                pl.BlockSpec(memory_space=pltpu.MemorySpace.SMEM),
                pl.BlockSpec(memory_space=pltpu.MemorySpace.SMEM),
            ],
            out_specs=pl.BlockSpec((tile_rows, LANES), lambda i: (i, 0)),
        ),
        compiler_params=pltpu.CompilerParams(
            dimension_semantics=("parallel",),   # batch tiles independent
            vmem_limit_bytes=32 * 1024 * 1024,   # headroom for 2 MiB blocks on v5e
        ),
        cost_estimate=cost,
    )(x2d, w_s, b_s)

    if padded:
        return out2d.reshape(-1)[:n].reshape(n, 1)
    return out2d.reshape(n, 1)


if __name__ == "__main__":
    key = jax.random.PRNGKey(0)
    kx, kw, kb, kx2, kx3 = jax.random.split(key, 5)

    # nn.Linear(1, 1) init: uniform(-1/sqrt(fan_in), 1/sqrt(fan_in)), fan_in=1.
    w = jax.random.uniform(kw, (1, 1), jnp.float32, minval=-1.0, maxval=1.0)
    b = jax.random.uniform(kb, (1,), jnp.float32, minval=-1.0, maxval=1.0)

    def ref(xv):
        return xv @ w.T + b

    # 1) Small batch (module-scale input): plain-JAX fast path.
    x_small = jax.random.normal(kx, (8, 1), jnp.float32)
    y_small = jax.block_until_ready(net_forward(x_small, w, b))
    assert y_small.shape == (8, 1)
    assert jnp.allclose(y_small, ref(x_small), atol=1e-6, rtol=1e-6)

    # 2) Pallas path, N a multiple of 128: zero-copy lane-dense reshape,
    #    2 parallel grid steps (v7x megacore).
    x_aligned = jax.random.normal(kx2, (131072, 1), jnp.float32)
    y_aligned = jax.block_until_ready(net_forward(x_aligned, w, b))
    assert y_aligned.shape == (131072, 1)
    assert jnp.allclose(y_aligned, ref(x_aligned), atol=1e-6, rtol=1e-6)

    # 3) Pallas path, ragged N: pad-to-128 + partial boundary block.
    x_ragged = jax.random.normal(kx3, (70077, 1), jnp.float32)
    y_ragged = jax.block_until_ready(net_forward(x_ragged, w, b))
    assert y_ragged.shape == (70077, 1)
    assert jnp.allclose(y_ragged, ref(x_ragged), atol=1e-6, rtol=1e-6)

    print("KERNEL_OK")
</pallas_src>

<mosaic_0001>
module attributes {stable_mosaic.version = 11 : i64} {
  func.func @linear_kernel(%arg0: i32, %arg1: memref<512x128xf32, #tpu.memory_space<vmem>>, %arg2: memref<1xf32, #tpu.memory_space<smem>>, %arg3: memref<1xf32, #tpu.memory_space<smem>>, %arg4: memref<512x128xf32, #tpu.memory_space<vmem>>) attributes {dimension_semantics = [#tpu.dimension_semantics<parallel>], iteration_bounds = array<i64: 2>, scalar_prefetch = 0 : i64, scratch_operands = 0 : i64, tpu.core_type = #tpu.core_type<tc>, window_params = [{transform_indices = @transform_0, window_bounds = array<i64: 512, 128>}, {transform_indices = @transform_1, window_bounds = array<i64: 1>}, {transform_indices = @transform_2, window_bounds = array<i64: 1>}, {transform_indices = @transform_3, window_bounds = array<i64: 512, 128>}]} {
    %c0 = arith.constant 0 : index
    %c0_0 = arith.constant 0 : index
    %0 = vector.load %arg1[%c0, %c0_0] : memref<512x128xf32, #tpu.memory_space<vmem>>, vector<512x128xf32>
    %c0_1 = arith.constant 0 : index
    %1 = memref.load %arg2[%c0_1] : memref<1xf32, #tpu.memory_space<smem>>
    %2 = vector.broadcast %1 : f32 to vector<512x128xf32>
    %3 = arith.mulf %0, %2 : vector<512x128xf32>
    %c0_2 = arith.constant 0 : index
    %4 = memref.load %arg3[%c0_2] : memref<1xf32, #tpu.memory_space<smem>>
    %5 = vector.broadcast %4 : f32 to vector<512x128xf32>
    %6 = arith.addf %3, %5 : vector<512x128xf32>
    %c0_3 = arith.constant 0 : index
    %c0_4 = arith.constant 0 : index
    %7 = vector.load %arg4[%c0_3, %c0_4] : memref<512x128xf32, #tpu.memory_space<vmem>>, vector<512x128xf32>
    tpu.vector_store %arg4[%c0_3, %c0_4], %6 {strides = array<i32>} : memref<512x128xf32, #tpu.memory_space<vmem>>, vector<512x128xf32>,
    return
  }
  func.func @transform_0(%arg0: i32) -> (i32, i32) {
    %c0_i32 = arith.constant 0 : i32
    %c0_i32_0 = arith.constant 0 : i32
    return %arg0, %c0_i32 : i32, i32
  }
  func.func @transform_1(%arg0: i32) -> i32 {
    %c0_i32 = arith.constant 0 : i32
    %c0_i32_0 = arith.constant 0 : i32
    return %c0_i32 : i32
  }
  func.func @transform_2(%arg0: i32) -> i32 {
    %c0_i32 = arith.constant 0 : i32
    %c0_i32_0 = arith.constant 0 : i32
    return %c0_i32 : i32
  }
  func.func @transform_3(%arg0: i32) -> (i32, i32) {
    %c0_i32 = arith.constant 0 : i32
    %c0_i32_0 = arith.constant 0 : i32
    return %arg0, %c0_i32 : i32, i32
  }
}

</mosaic_0001>

<llo_original>
// kernel: tpu_custom_call.1
$region0: #{tpu_custom_call.1}
  #allocation0 [shape = 'u32[]', space=smem, size = 0x4, offset = 0x4, fixed_abs, tag = 'smem constant byte address 0x4 - core index']
  #allocation1 [shape = 'u32[144,128]{1,0:T(1,128)}', space=vmem, size = 0x12000, scoped, tag = 'internal scratch']
  #allocation2 [shape = 'f32[1]{0:T(128)S(6)}', space=smem, size = 0x200, scoped, tag = 'scoped memory for tpu_custom_call.1']
  #allocation3 [shape = 'f32[1]{0:T(128)S(6)}', space=smem, size = 0x200, scoped, tag = 'scoped memory for tpu_custom_call.1']
  %s0 = inlined_call_operand.hbm [shape: f32[1024,128], index: 0, kind: input, shape index: {}]
  %s1 = inlined_call_operand.<no memory space> [shape: f32[1], index: 1, kind: input, shape index: {}]
  %s2 = inlined_call_operand.<no memory space> [shape: f32[1], index: 2, kind: input, shape index: {}]
  %s3 = inlined_call_operand.hbm [shape: f32[1024,128], index: 3, kind: output, shape index: {}]
  %s4 = sld [smem:[#allocation0]]
  $region49: #{tpu_custom_call.1} parent=0
    _
  %s6 = ssub.s32 1, %s4
  %s7 = scalar_select 0, %s6, %s4
  %8 = sst [smem:[#allocation2]] %s1
  %9 = sst [smem:[#allocation3]] %s2
  $region1: #{tpu_custom_call.1} parent=0
    #allocation4 [shape = 'u8[524288]{0}', space=vmem, size = 0x80000, scoped, tag = 'input window, operand 0']
    #allocation5 [shape = 's32[2]{0}', space=sflag, size = 0x8, scoped, tag = 'scoped memory for tpu_custom_call.1']
    #allocation6 [shape = 's32[2]{0}', space=sflag, size = 0x8, scoped, tag = 'scoped memory for tpu_custom_call.1']
    #allocation7 [shape = 'u8[524288]{0}', space=vmem, size = 0x80000, scoped, tag = 'output window, operand 0']
    %10 = vsyncpa [#allocation5], 0
    %s11 = scalar_lea.sflag [#allocation5], 1
    %12 = vsyncpa %s11, 0
    %13 = vsyncpa [#allocation6], 0
    %s14 = scalar_lea.sflag [#allocation6], 1
    %15 = vsyncpa %s14, 0
    loop: start=0, step=1, limit=4
    $region2: #{tpu_custom_call.1} parent=1 // loop_pre_header
      _
    $region3: #{tpu_custom_call.1} parent=1 // loop_header
      %s17 = sphi 0, %s21
      %p18 = scmp.ge.s32.totalorder %s17, 4
      %s27 = sphi 0, %s29
      %s30 = sphi 0, %s27
      %s31 = sphi 0, %s30
      %s47 = sphi 0, %s31
      %s51 = sphi 0, %s51
      %s53 = sphi 0, %s51
      %s54 = sphi 0, %s53
      %s68 = sphi 0, %s54
      %s72 = sphi 0, %s72
      %s74 = sphi 0, %s72
      %s75 = sphi 0, %s74
      %s89 = sphi 0, %s75
      %s95 = sphi 0, %s97
      %s98 = sphi 0, %s95
      %s99 = sphi 0, %s98
      %s115 = sphi 0, %s99
    $region4: #{tpu_custom_call.1} parent=1 // loop_header_branch
      %20 = sbr.rel (%p18) target = $region8
    $region5: #{tpu_custom_call.1} parent=1 // loop_body
      %s22 = ssub.s32 %s17, 1
      %s23 = ssub.s32 %s17, 2
      %s24 = sadd.s32 %s17, 1
      %s25 = ssub.s32 %s17, %s24
      %p26 = scmp.eq.s32.totalorder %s25, 0
      %s28 = sadd.s32 %s27, 1
      %s29 = scalar_select %p26, %s27, %s28
      %p32 = pneg %p26
      %p33 = scmp.eq.s32.totalorder %s17, 1
      %p34 = por %p32, %p33
      %p35 = scmp.ne.s32.totalorder %s27, %s30
      %p36 = scmp.eq.s32.totalorder %s17, 0
      %p37 = por %p35, %p36
      %p38 = scmp.ne.s32.totalorder %s27, %s30
      %p39 = scmp.eq.s32.totalorder %s22, 1
      %p40 = por %p38, %p39
      %p41 = scmp.ne.s32.totalorder %s30, %s31
      %p42 = scmp.eq.s32.totalorder %s22, 0
      %p43 = por %p41, %p42
      %p44 = scmp.ne.s32.totalorder %s30, %s31
      %p45 = scmp.eq.s32.totalorder %s23, 1
      %p46 = por %p44, %p45
      %p48 = scmp.ne.s32.totalorder %s31, %s47
      %p49 = scmp.eq.s32.totalorder %s23, 0
      %p50 = por %p48, %p49
      %s52 = sadd.s32 %s51, 1
      %p55 = scmp.eq.s32.totalorder %s17, 1
      %p56 = scmp.ne.s32.totalorder %s51, %s53
      %p57 = scmp.eq.s32.totalorder %s17, 0
      %p58 = por %p56, %p57
      %p59 = scmp.ne.s32.totalorder %s51, %s53
      %p60 = scmp.eq.s32.totalorder %s22, 1
      %p61 = por %p59, %p60
      %p62 = scmp.ne.s32.totalorder %s53, %s54
      %p63 = scmp.eq.s32.totalorder %s22, 0
      %p64 = por %p62, %p63
      %p65 = scmp.ne.s32.totalorder %s53, %s54
      %p66 = scmp.eq.s32.totalorder %s23, 1
      %p67 = por %p65, %p66
      %p69 = scmp.ne.s32.totalorder %s54, %s68
      %p70 = scmp.eq.s32.totalorder %s23, 0
      %p71 = por %p69, %p70
      %s73 = sadd.s32 %s72, 1
      %p76 = scmp.eq.s32.totalorder %s17, 1
      %p77 = scmp.ne.s32.totalorder %s72, %s74
      %p78 = scmp.eq.s32.totalorder %s17, 0
      %p79 = por %p77, %p78
      %p80 = scmp.ne.s32.totalorder %s72, %s74
      %p81 = scmp.eq.s32.totalorder %s22, 1
      %p82 = por %p80, %p81
      %p83 = scmp.ne.s32.totalorder %s74, %s75
      %p84 = scmp.eq.s32.totalorder %s22, 0
      %p85 = por %p83, %p84
      %p86 = scmp.ne.s32.totalorder %s74, %s75
      %p87 = scmp.eq.s32.totalorder %s23, 1
      %p88 = por %p86, %p87
      %p90 = scmp.ne.s32.totalorder %s75, %s89
      %p91 = scmp.eq.s32.totalorder %s23, 0
      %p92 = por %p90, %p91
      %s93 = ssub.s32 %s17, %s24
      %p94 = scmp.eq.s32.totalorder %s93, 0
      %s96 = sadd.s32 %s95, 1
      %s97 = scalar_select %p94, %s95, %s96
      %p100 = pneg %p94
      %p101 = scmp.eq.s32.totalorder %s17, 1
      %p102 = por %p100, %p101
      %p103 = scmp.ne.s32.totalorder %s95, %s98
      %p104 = scmp.eq.s32.totalorder %s17, 0
      %p105 = por %p103, %p104
      %p106 = scmp.ne.s32.totalorder %s95, %s98
      %p107 = scmp.eq.s32.totalorder %s22, 1
      %p108 = por %p106, %p107
      %p109 = scmp.ne.s32.totalorder %s98, %s99
      %p110 = scmp.eq.s32.totalorder %s22, 0
      %p111 = por %p109, %p110
      %p112 = scmp.ne.s32.totalorder %s98, %s99
      %p113 = scmp.eq.s32.totalorder %s23, 1
      %p114 = por %p112, %p113
      %p116 = scmp.ne.s32.totalorder %s99, %s115
      %p117 = scmp.eq.s32.totalorder %s23, 0
      %p118 = por %p116, %p117
      %p119 = scmp.le.s32.totalorder 1, %s17
      %p120 = scmp.lt.s32.totalorder %s17, 3
      %p121 = pnand %p119, %p120
      %p122 = pneg %p121
      // Predicated region
      $region9: #{tpu_custom_call.1} parent=5 // pred_check
        _
      $region10: #{tpu_custom_call.1} parent=5 // pred_check_branch
        %124 = sbr.rel (%p121) target = $region12
      $region11: #{tpu_custom_call.1} parent=5 // pred_region
        %s125 = ssub.s32 %s17, 1
        // Predicated region
        $region13: #{tpu_custom_call.1} parent=11 // pred_check
          %p126 = pneg %p64
        $region14: #{tpu_custom_call.1} parent=11 // pred_check_branch
          %128 = sbr.rel (%p126) target = $region16
        $region15: #{tpu_custom_call.1} parent=11 // pred_region
          _
        $region16: #{tpu_custom_call.1} parent=11 // pred_fallthru
          _
        // Predicated region
        $region17: #{tpu_custom_call.1} parent=11 // pred_check
          %p129 = pneg %p85
        $region18: #{tpu_custom_call.1} parent=11 // pred_check_branch
          %131 = sbr.rel (%p129) target = $region20
        $region19: #{tpu_custom_call.1} parent=11 // pred_region
          _
        $region20: #{tpu_custom_call.1} parent=11 // pred_fallthru
          _
      $region12: #{tpu_custom_call.1} parent=5 // pred_fallthru
        _
      %p132 = scmp.lt.s32.totalorder %s17, 2
      // Predicated region
      $region21: #{tpu_custom_call.1} parent=5 // pred_check
        %p133 = pneg %p132
      $region22: #{tpu_custom_call.1} parent=5 // pred_check_branch
        %135 = sbr.rel (%p133) target = $region24
      $region23: #{tpu_custom_call.1} parent=5 // pred_region
        // Predicated region
        $region25: #{tpu_custom_call.1} parent=23 // pred_check
          %p136 = pneg %p37
        $region26: #{tpu_custom_call.1} parent=23 // pred_check_branch
          %138 = sbr.rel (%p136) target = $region28
        $region27: #{tpu_custom_call.1} parent=23 // pred_region
          %s139 = sand.u32 %s27, 1
          %s140 = scalar_lea.sflag [#allocation5], %s139
          %s141 = sand.u32 %s27, 1
          %s142 = smul.addr %s141, 512
          %s143 = scalar_lea.vmem [#allocation4], %s142
          %s144 = smul.u32 64, %s17
          %s146 = ssub.s32 8192, 8192
          %147 = vsyncadd %s140, %s146
          %s148 = smul.addr %s144, 128
          %s149 = scalar_lea.hbm %s0, %s148
          %s150 = sshll.u32 %s143, 4
          %s151 = int_to_ptr.vmem [resolvable:$true] %s150
          %156 = dma.hbm_to_vmem [thread:$0]  %s149, 8192, %s151, %s140, 128, 128, 8
        $region28: #{tpu_custom_call.1} parent=23 // pred_fallthru
          _
      $region24: #{tpu_custom_call.1} parent=5 // pred_fallthru
        _
      %p157 = scmp.le.s32.totalorder 1, %s17
      %p158 = scmp.lt.s32.totalorder %s17, 3
      %p159 = pnand %p157, %p158
      %p160 = pneg %p159
      // Predicated region
      $region29: #{tpu_custom_call.1} parent=5 // pred_check
        _
      $region30: #{tpu_custom_call.1} parent=5 // pred_check_branch
        %162 = sbr.rel (%p159) target = $region32
      $region31: #{tpu_custom_call.1} parent=5 // pred_region
        %s163 = ssub.s32 %s17, 1
        %s164 = sand.u32 %s30, 1
        %s165 = scalar_lea.sflag [#allocation5], %s164
        %s166 = sand.u32 %s30, 1
        %s167 = smul.addr %s166, 512
        %s168 = scalar_lea.vmem [#allocation4], %s167
        // Predicated region
        $region33: #{tpu_custom_call.1} parent=31 // pred_check
          %p169 = pneg %p43
        $region34: #{tpu_custom_call.1} parent=31 // pred_check_branch
          %171 = sbr.rel (%p169) target = $region36
        $region35: #{tpu_custom_call.1} parent=31 // pred_region
          %172 = dma.done %s165, 8192
        $region36: #{tpu_custom_call.1} parent=31 // pred_fallthru
          _
        %s173 = sand.u32 %s30, 1
        %s174 = scalar_lea.sflag [#allocation5], %s173
        %s175 = sand.u32 %s30, 1
        %s176 = smul.addr %s175, 512
        %s177 = scalar_lea.vmem [#allocation4], %s176
        %p178 = pneg %p43
        %p179 = pneg %p40
        %p180 = pneg %p64
        %p181 = pneg %p61
        %p182 = pneg %p85
        %p183 = pneg %p82
        %p184 = pneg %p111
        %p185 = pneg %p108
        %s186 = sand.u32 %s98, 1
        %s187 = scalar_lea.sflag [#allocation6], %s186
        %s188 = sand.u32 %s98, 1
        %s189 = smul.addr %s188, 512
        %s190 = scalar_lea.vmem [#allocation7], %s189
        %s191 = smul.u32 64, %s22
        %s192 = smul.u32 64, %s22
        %v193 = vld [vmem:[%s168] sm:$0xff]
        %v194 = vld [vmem:[%s168 + $0x8] sm:$0xff]
        %v195 = vld [vmem:[%s168 + $0x10] sm:$0xff]
        %v196 = vld [vmem:[%s168 + $0x18] sm:$0xff]
        %v197 = vld [vmem:[%s168 + $0x20] sm:$0xff]
        %v198 = vld [vmem:[%s168 + $0x28] sm:$0xff]
        %v199 = vld [vmem:[%s168 + $0x30] sm:$0xff]
        %v200 = vld [vmem:[%s168 + $0x38] sm:$0xff]
        %v201 = vld [vmem:[%s168 + $0x40] sm:$0xff]
        %v202 = vld [vmem:[%s168 + $0x48] sm:$0xff]
        %v203 = vld [vmem:[%s168 + $0x50] sm:$0xff]
        %v204 = vld [vmem:[%s168 + $0x58] sm:$0xff]
        %v205 = vld [vmem:[%s168 + $0x60] sm:$0xff]
        %v206 = vld [vmem:[%s168 + $0x68] sm:$0xff]
        %v207 = vld [vmem:[%s168 + $0x70] sm:$0xff]
        %v208 = vld [vmem:[%s168 + $0x78] sm:$0xff]
        %v209 = vld [vmem:[%s168 + $0x80] sm:$0xff]
        %v210 = vld [vmem:[%s168 + $0x88] sm:$0xff]
        %v211 = vld [vmem:[%s168 + $0x90] sm:$0xff]
        %v212 = vld [vmem:[%s168 + $0x98] sm:$0xff]
        %v213 = vld [vmem:[%s168 + $0xa0] sm:$0xff]
        %v214 = vld [vmem:[%s168 + $0xa8] sm:$0xff]
        %v215 = vld [vmem:[%s168 + $0xb0] sm:$0xff]
        %v216 = vld [vmem:[%s168 + $0xb8] sm:$0xff]
        %v217 = vld [vmem:[%s168 + $0xc0] sm:$0xff]
        %v218 = vld [vmem:[%s168 + $0xc8] sm:$0xff]
        %v219 = vld [vmem:[%s168 + $0xd0] sm:$0xff]
        %v220 = vld [vmem:[%s168 + $0xd8] sm:$0xff]
        %v221 = vld [vmem:[%s168 + $0xe0] sm:$0xff]
        %v222 = vld [vmem:[%s168 + $0xe8] sm:$0xff]
        %v223 = vld [vmem:[%s168 + $0xf0] sm:$0xff]
        %v224 = vld [vmem:[%s168 + $0xf8] sm:$0xff]
        %v225 = vld [vmem:[%s168 + $0x100] sm:$0xff]
        %v226 = vld [vmem:[%s168 + $0x108] sm:$0xff]
        %v227 = vld [vmem:[%s168 + $0x110] sm:$0xff]
        %v228 = vld [vmem:[%s168 + $0x118] sm:$0xff]
        %v229 = vld [vmem:[%s168 + $0x120] sm:$0xff]
        %v230 = vld [vmem:[%s168 + $0x128] sm:$0xff]
        %v231 = vld [vmem:[%s168 + $0x130] sm:$0xff]
        %v232 = vld [vmem:[%s168 + $0x138] sm:$0xff]
        %v233 = vld [vmem:[%s168 + $0x140] sm:$0xff]
        %v234 = vld [vmem:[%s168 + $0x148] sm:$0xff]
        %v235 = vld [vmem:[%s168 + $0x150] sm:$0xff]
        %v236 = vld [vmem:[%s168 + $0x158] sm:$0xff]
        %v237 = vld [vmem:[%s168 + $0x160] sm:$0xff]
        %v238 = vld [vmem:[%s168 + $0x168] sm:$0xff]
        %v239 = vld [vmem:[%s168 + $0x170] sm:$0xff]
        %v240 = vld [vmem:[%s168 + $0x178] sm:$0xff]
        %v241 = vld [vmem:[%s168 + $0x180] sm:$0xff]
        %v242 = vld [vmem:[%s168 + $0x188] sm:$0xff]
        %v243 = vld [vmem:[%s168 + $0x190] sm:$0xff]
        %v244 = vld [vmem:[%s168 + $0x198] sm:$0xff]
        %v245 = vld [vmem:[%s168 + $0x1a0] sm:$0xff]
        %v246 = vld [vmem:[%s168 + $0x1a8] sm:$0xff]
        %v247 = vld [vmem:[%s168 + $0x1b0] sm:$0xff]
        %v248 = vld [vmem:[%s168 + $0x1b8] sm:$0xff]
        %v249 = vld [vmem:[%s168 + $0x1c0] sm:$0xff]
        %v250 = vld [vmem:[%s168 + $0x1c8] sm:$0xff]
        %v251 = vld [vmem:[%s168 + $0x1d0] sm:$0xff]
        %v252 = vld [vmem:[%s168 + $0x1d8] sm:$0xff]
        %v253 = vld [vmem:[%s168 + $0x1e0] sm:$0xff]
        %v254 = vld [vmem:[%s168 + $0x1e8] sm:$0xff]
        %v255 = vld [vmem:[%s168 + $0x1f0] sm:$0xff]
        %v256 = vld [vmem:[%s168 + $0x1f8] sm:$0xff]
        %s257 = sld [smem:[#allocation2]]
        %v258 = vstv %s257
        %v259 = vmul.f32 %v193, %v258
        %v260 = vmul.f32 %v194, %v258
        %v261 = vmul.f32 %v195, %v258
        %v262 = vmul.f32 %v196, %v258
        %v263 = vmul.f32 %v197, %v258
        %v264 = vmul.f32 %v198, %v258
        %v265 = vmul.f32 %v199, %v258
        %v266 = vmul.f32 %v200, %v258
        %v267 = vmul.f32 %v201, %v258
        %v268 = vmul.f32 %v202, %v258
        %v269 = vmul.f32 %v203, %v258
        %v270 = vmul.f32 %v204, %v258
        %v271 = vmul.f32 %v205, %v258
        %v272 = vmul.f32 %v206, %v258
        %v273 = vmul.f32 %v207, %v258
        %v274 = vmul.f32 %v208, %v258
        %v275 = vmul.f32 %v209, %v258
        %v276 = vmul.f32 %v210, %v258
        %v277 = vmul.f32 %v211, %v258
        %v278 = vmul.f32 %v212, %v258
        %v279 = vmul.f32 %v213, %v258
        %v280 = vmul.f32 %v214, %v258
        %v281 = vmul.f32 %v215, %v258
        %v282 = vmul.f32 %v216, %v258
        %v283 = vmul.f32 %v217, %v258
        %v284 = vmul.f32 %v218, %v258
        %v285 = vmul.f32 %v219, %v258
        %v286 = vmul.f32 %v220, %v258
        %v287 = vmul.f32 %v221, %v258
        %v288 = vmul.f32 %v222, %v258
        %v289 = vmul.f32 %v223, %v258
        %v290 = vmul.f32 %v224, %v258
        %v291 = vmul.f32 %v225, %v258
        %v292 = vmul.f32 %v226, %v258
        %v293 = vmul.f32 %v227, %v258
        %v294 = vmul.f32 %v228, %v258
        %v295 = vmul.f32 %v229, %v258
        %v296 = vmul.f32 %v230, %v258
        %v297 = vmul.f32 %v231, %v258
        %v298 = vmul.f32 %v232, %v258
        %v299 = vmul.f32 %v233, %v258
        %v300 = vmul.f32 %v234, %v258
        %v301 = vmul.f32 %v235, %v258
        %v302 = vmul.f32 %v236, %v258
        %v303 = vmul.f32 %v237, %v258
        %v304 = vmul.f32 %v238, %v258
        %v305 = vmul.f32 %v239, %v258
        %v306 = vmul.f32 %v240, %v258
        %v307 = vmul.f32 %v241, %v258
        %v308 = vmul.f32 %v242, %v258
        %v309 = vmul.f32 %v243, %v258
        %v310 = vmul.f32 %v244, %v258
        %v311 = vmul.f32 %v245, %v258
        %v312 = vmul.f32 %v246, %v258
        %v313 = vmul.f32 %v247, %v258
        %v314 = vmul.f32 %v248, %v258
        %v315 = vmul.f32 %v249, %v258
        %v316 = vmul.f32 %v250, %v258
        %v317 = vmul.f32 %v251, %v258
        %v318 = vmul.f32 %v252, %v258
        %v319 = vmul.f32 %v253, %v258
        %v320 = vmul.f32 %v254, %v258
        %v321 = vmul.f32 %v255, %v258
        %v322 = vmul.f32 %v256, %v258
        %s323 = sld [smem:[#allocation3]]
        %v324 = vstv %s323
        %v325 = vadd.f32 %v259, %v324
        %v326 = vadd.f32 %v260, %v324
        %v327 = vadd.f32 %v261, %v324
        %v328 = vadd.f32 %v262, %v324
        %v329 = vadd.f32 %v263, %v324
        %v330 = vadd.f32 %v264, %v324
        %v331 = vadd.f32 %v265, %v324
        %v332 = vadd.f32 %v266, %v324
        %v333 = vadd.f32 %v267, %v324
        %v334 = vadd.f32 %v268, %v324
        %v335 = vadd.f32 %v269, %v324
        %v336 = vadd.f32 %v270, %v324
        %v337 = vadd.f32 %v271, %v324
        %v338 = vadd.f32 %v272, %v324
        %v339 = vadd.f32 %v273, %v324
        %v340 = vadd.f32 %v274, %v324
        %v341 = vadd.f32 %v275, %v324
        %v342 = vadd.f32 %v276, %v324
        %v343 = vadd.f32 %v277, %v324
        %v344 = vadd.f32 %v278, %v324
        %v345 = vadd.f32 %v279, %v324
        %v346 = vadd.f32 %v280, %v324
        %v347 = vadd.f32 %v281, %v324
        %v348 = vadd.f32 %v282, %v324
        %v349 = vadd.f32 %v283, %v324
        %v350 = vadd.f32 %v284, %v324
        %v351 = vadd.f32 %v285, %v324
        %v352 = vadd.f32 %v286, %v324
        %v353 = vadd.f32 %v287, %v324
        %v354 = vadd.f32 %v288, %v324
        %v355 = vadd.f32 %v289, %v324
        %v356 = vadd.f32 %v290, %v324
        %v357 = vadd.f32 %v291, %v324
        %v358 = vadd.f32 %v292, %v324
        %v359 = vadd.f32 %v293, %v324
        %v360 = vadd.f32 %v294, %v324
        %v361 = vadd.f32 %v295, %v324
        %v362 = vadd.f32 %v296, %v324
        %v363 = vadd.f32 %v297, %v324
        %v364 = vadd.f32 %v298, %v324
        %v365 = vadd.f32 %v299, %v324
        %v366 = vadd.f32 %v300, %v324
        %v367 = vadd.f32 %v301, %v324
        %v368 = vadd.f32 %v302, %v324
        %v369 = vadd.f32 %v303, %v324
        %v370 = vadd.f32 %v304, %v324
        %v371 = vadd.f32 %v305, %v324
        %v372 = vadd.f32 %v306, %v324
        %v373 = vadd.f32 %v307, %v324
        %v374 = vadd.f32 %v308, %v324
        %v375 = vadd.f32 %v309, %v324
        %v376 = vadd.f32 %v310, %v324
        %v377 = vadd.f32 %v311, %v324
        %v378 = vadd.f32 %v312, %v324
        %v379 = vadd.f32 %v313, %v324
        %v380 = vadd.f32 %v314, %v324
        %v381 = vadd.f32 %v315, %v324
        %v382 = vadd.f32 %v316, %v324
        %v383 = vadd.f32 %v317, %v324
        %v384 = vadd.f32 %v318, %v324
        %v385 = vadd.f32 %v319, %v324
        %v386 = vadd.f32 %v320, %v324
        %v387 = vadd.f32 %v321, %v324
        %v388 = vadd.f32 %v322, %v324
        %389 = vst [vmem:[%s190] sm:$0xff] %v325
        %390 = vst [vmem:[%s190 + $0x8] sm:$0xff] %v326
        %391 = vst [vmem:[%s190 + $0x10] sm:$0xff] %v327
        %392 = vst [vmem:[%s190 + $0x18] sm:$0xff] %v328
        %393 = vst [vmem:[%s190 + $0x20] sm:$0xff] %v329
        %394 = vst [vmem:[%s190 + $0x28] sm:$0xff] %v330
        %395 = vst [vmem:[%s190 + $0x30] sm:$0xff] %v331
        %396 = vst [vmem:[%s190 + $0x38] sm:$0xff] %v332
        %397 = vst [vmem:[%s190 + $0x40] sm:$0xff] %v333
        %398 = vst [vmem:[%s190 + $0x48] sm:$0xff] %v334
        %399 = vst [vmem:[%s190 + $0x50] sm:$0xff] %v335
        %400 = vst [vmem:[%s190 + $0x58] sm:$0xff] %v336
        %401 = vst [vmem:[%s190 + $0x60] sm:$0xff] %v337
        %402 = vst [vmem:[%s190 + $0x68] sm:$0xff] %v338
        %403 = vst [vmem:[%s190 + $0x70] sm:$0xff] %v339
        %404 = vst [vmem:[%s190 + $0x78] sm:$0xff] %v340
        %405 = vst [vmem:[%s190 + $0x80] sm:$0xff] %v341
        %406 = vst [vmem:[%s190 + $0x88] sm:$0xff] %v342
        %407 = vst [vmem:[%s190 + $0x90] sm:$0xff] %v343
        %408 = vst [vmem:[%s190 + $0x98] sm:$0xff] %v344
        %409 = vst [vmem:[%s190 + $0xa0] sm:$0xff] %v345
        %410 = vst [vmem:[%s190 + $0xa8] sm:$0xff] %v346
        %411 = vst [vmem:[%s190 + $0xb0] sm:$0xff] %v347
        %412 = vst [vmem:[%s190 + $0xb8] sm:$0xff] %v348
        %413 = vst [vmem:[%s190 + $0xc0] sm:$0xff] %v349
        %414 = vst [vmem:[%s190 + $0xc8] sm:$0xff] %v350
        %415 = vst [vmem:[%s190 + $0xd0] sm:$0xff] %v351
        %416 = vst [vmem:[%s190 + $0xd8] sm:$0xff] %v352
        %417 = vst [vmem:[%s190 + $0xe0] sm:$0xff] %v353
        %418 = vst [vmem:[%s190 + $0xe8] sm:$0xff] %v354
        %419 = vst [vmem:[%s190 + $0xf0] sm:$0xff] %v355
        %420 = vst [vmem:[%s190 + $0xf8] sm:$0xff] %v356
        %421 = vst [vmem:[%s190 + $0x100] sm:$0xff] %v357
        %422 = vst [vmem:[%s190 + $0x108] sm:$0xff] %v358
        %423 = vst [vmem:[%s190 + $0x110] sm:$0xff] %v359
        %424 = vst [vmem:[%s190 + $0x118] sm:$0xff] %v360
        %425 = vst [vmem:[%s190 + $0x120] sm:$0xff] %v361
        %426 = vst [vmem:[%s190 + $0x128] sm:$0xff] %v362
        %427 = vst [vmem:[%s190 + $0x130] sm:$0xff] %v363
        %428 = vst [vmem:[%s190 + $0x138] sm:$0xff] %v364
        %429 = vst [vmem:[%s190 + $0x140] sm:$0xff] %v365
        %430 = vst [vmem:[%s190 + $0x148] sm:$0xff] %v366
        %431 = vst [vmem:[%s190 + $0x150] sm:$0xff] %v367
        %432 = vst [vmem:[%s190 + $0x158] sm:$0xff] %v368
        %433 = vst [vmem:[%s190 + $0x160] sm:$0xff] %v369
        %434 = vst [vmem:[%s190 + $0x168] sm:$0xff] %v370
        %435 = vst [vmem:[%s190 + $0x170] sm:$0xff] %v371
        %436 = vst [vmem:[%s190 + $0x178] sm:$0xff] %v372
        %437 = vst [vmem:[%s190 + $0x180] sm:$0xff] %v373
        %438 = vst [vmem:[%s190 + $0x188] sm:$0xff] %v374
        %439 = vst [vmem:[%s190 + $0x190] sm:$0xff] %v375
        %440 = vst [vmem:[%s190 + $0x198] sm:$0xff] %v376
        %441 = vst [vmem:[%s190 + $0x1a0] sm:$0xff] %v377
        %442 = vst [vmem:[%s190 + $0x1a8] sm:$0xff] %v378
        %443 = vst [vmem:[%s190 + $0x1b0] sm:$0xff] %v379
        %444 = vst [vmem:[%s190 + $0x1b8] sm:$0xff] %v380
        %445 = vst [vmem:[%s190 + $0x1c0] sm:$0xff] %v381
        %446 = vst [vmem:[%s190 + $0x1c8] sm:$0xff] %v382
        %447 = vst [vmem:[%s190 + $0x1d0] sm:$0xff] %v383
        %448 = vst [vmem:[%s190 + $0x1d8] sm:$0xff] %v384
        %449 = vst [vmem:[%s190 + $0x1e0] sm:$0xff] %v385
        %450 = vst [vmem:[%s190 + $0x1e8] sm:$0xff] %v386
        %451 = vst [vmem:[%s190 + $0x1f0] sm:$0xff] %v387
        %452 = vst [vmem:[%s190 + $0x1f8] sm:$0xff] %v388
        %s453 = sand.u32 %s98, 1
        %s454 = scalar_lea.sflag [#allocation6], %s453
        %s455 = sand.u32 %s98, 1
        %s456 = smul.addr %s455, 512
        %s457 = scalar_lea.vmem [#allocation7], %s456
        // Predicated region
        $region37: #{tpu_custom_call.1} parent=31 // pred_check
          %p458 = pneg %p108
        $region38: #{tpu_custom_call.1} parent=31 // pred_check_branch
          %460 = sbr.rel (%p458) target = $region40
        $region39: #{tpu_custom_call.1} parent=31 // pred_region
          %s461 = smul.u32 64, %s22
          %s463 = ssub.s32 8192, 8192
          %464 = vsyncadd %s454, %s463
          %s465 = smul.addr %s461, 128
          %s466 = scalar_lea.hbm %s3, %s465
          %s467 = sshll.u32 %s457, 4
          %s468 = int_to_ptr.vmem [resolvable:$true] %s467
          %473 = dma.vmem_to_hbm [thread:$0]  %s468, 8192, %s466, %s454, 128, 128, 8
        $region40: #{tpu_custom_call.1} parent=31 // pred_fallthru
          _
      $region32: #{tpu_custom_call.1} parent=5 // pred_fallthru
        _
      %p474 = scmp.le.s32.totalorder 2, %s17
      // Predicated region
      $region41: #{tpu_custom_call.1} parent=5 // pred_check
        %p475 = pneg %p474
      $region42: #{tpu_custom_call.1} parent=5 // pred_check_branch
        %477 = sbr.rel (%p475) target = $region44
      $region43: #{tpu_custom_call.1} parent=5 // pred_region
        %s478 = ssub.s32 %s17, 2
        // Predicated region
        $region45: #{tpu_custom_call.1} parent=43 // pred_check
          %p479 = pneg %p114
        $region46: #{tpu_custom_call.1} parent=43 // pred_check_branch
          %481 = sbr.rel (%p479) target = $region48
        $region47: #{tpu_custom_call.1} parent=43 // pred_region
          %s482 = sand.u32 %s99, 1
          %s483 = scalar_lea.sflag [#allocation6], %s482
          %s484 = sand.u32 %s99, 1
          %s485 = smul.addr %s484, 512
          %s486 = scalar_lea.vmem [#allocation7], %s485
          %487 = dma.done %s483, 8192
        $region48: #{tpu_custom_call.1} parent=43 // pred_fallthru
          _
      $region44: #{tpu_custom_call.1} parent=5 // pred_fallthru
        _
    $region6: #{tpu_custom_call.1} parent=1 // loop_footer
      %s21 = sadd.s32 1, %s17
    $region7: #{tpu_custom_call.1} parent=1 // loop_footer_branch
      %16 = sbr.rel target = $region3
    $region8: #{tpu_custom_call.1} parent=1 // loop_exit
      _
    %488 = vsyncpa [#allocation5], 1
    %s489 = scalar_lea.sflag [#allocation5], 1
    %490 = vsyncpa %s489, 1
    %491 = vsyncpa [#allocation6], 1
    %s492 = scalar_lea.sflag [#allocation6], 1
    %493 = vsyncpa %s492, 1

</llo_original>
